<compile_context>
chip_gen: v5e
topology: v5e:2x2
jax: 0.10.0
libtpu: 0.0.40
codegen_flags: <defaults>
</compile_context>

<pallas_src>
import functools

import jax
import jax.numpy as jnp
from jax import lax
from jax.experimental import pallas as pl
from jax.experimental.pallas import tpu as pltpu

SUBLANE = 8
LANE = 128


def _round_up(x, m):
    return ((x + m - 1) // m) * m


def _attn_classifier_kernel(h_ref, mask_ref, wa_ref, wfc_ref, b_ref, out_ref,
                            pooled_sc, *, tbc):
    # h_ref:    (TB, S, H)  hidden states for TB batch rows
    # mask_ref: (TB, S)     int32, nonzero == position is masked out
    # wa_ref:   (1, 1, H)   attention scoring vector
    # wfc_ref:  (H, Cp)     classifier weight (C padded to Cp, multiple of 128)
    # b_ref:    (1, Cp)     classifier bias (padded)
    # out_ref:  (TB, Cp)    logits (lane-dense, unmasked store)
    # pooled_sc:(TB, H)     VMEM scratch holding the attention-pooled vectors
    tb = h_ref.shape[0]
    n_chunks = tb // tbc
    wa = wa_ref[...]  # hoisted broadcast operand, reused by every chunk

    # Walk the tile tbc (=8) batch rows at a time so the elementwise temporaries are
    # only [tbc, S, H]; the non-unrolled loop bounds their live ranges.
    def chunk_body(i, carry):
        b0 = pl.multiple_of(i * tbc, tbc)
        hc = h_ref[pl.ds(b0, tbc), :, :]                     # [tbc, S, H]
        mc = mask_ref[pl.ds(b0, tbc), :]                     # [tbc, S]

        # Attention scores, lane-dense [tbc, S]: broadcast-mul + lane reduce over H.
        q = jnp.sum(hc * wa, axis=-1)
        # masked_fill(mask, -inf); fully-masked rows give NaN exactly like PyTorch.
        q = jnp.where(mc != 0, -jnp.inf, q)

        # Softmax over the sequence (lane) axis; normalization folded into pooled so
        # it costs one reciprocal per row (EUP) + a multiply, not tbc*S divides.
        q_max = jnp.max(q, axis=-1, keepdims=True)           # [tbc, 1]
        e = jnp.exp(q - q_max)                               # [tbc, S]
        denom = jnp.sum(e, axis=-1, keepdims=True)           # [tbc, 1]

        # Weighted pooling: sum_s e[b,s] * h[b,s,:] -> [tbc, H], then normalize.
        pooled = jnp.sum(e[:, :, None] * hc, axis=1)
        pooled = pooled * pl.reciprocal(denom, approx=False)
        pooled_sc[pl.ds(b0, tbc), :] = pooled
        return carry

    lax.fori_loop(0, n_chunks, chunk_body, 0)

    # Classifier: one MXU matmul per tile; lane-dense [TB, Cp] unmasked store.
    out_ref[...] = (
        jnp.dot(pooled_sc[...], wfc_ref[...], preferred_element_type=jnp.float32)
        + b_ref[...]
    )


@functools.partial(jax.jit, static_argnames=("block_b",))
def attention_classifier(hidden_states, mask, w_attn, w_fc, b_fc, *, block_b=None):
    """hidden_states: [B, S, H] f32; mask: [B, S] bool/int (True == masked).
    w_attn: [H, 1]; w_fc: [H, C]; b_fc: [C]. Returns logits [B, C]."""
    B, S, H = hidden_states.shape
    C = w_fc.shape[1]

    # --- VMEM budget, generation aware (v5e/v6e: 128 MiB physical, v7x: 64 MiB) ---
    try:
        vmem_cap = int(getattr(pltpu.get_tpu_info(), "vmem_capacity_bytes",
                               64 * 1024 * 1024))
    except Exception:
        vmem_cap = 64 * 1024 * 1024
    vmem_limit = (vmem_cap * 3) // 4                  # leave ~25% headroom
    h_block_budget = (12 * 1024 * 1024 if vmem_cap >= 96 * 1024 * 1024
                      else 4 * 1024 * 1024)

    bytes_per_row = S * H * 4
    b8 = _round_up(B, SUBLANE)

    if block_b is not None:
        tb = min(_round_up(block_b, SUBLANE), b8)
    else:
        tb_cap = max(SUBLANE,
                     (h_block_budget // max(1, bytes_per_row)) // SUBLANE * SUBLANE)
        tb_cap = min(tb_cap, 512, b8)
        # Guarantee >=2 grid steps when there is enough batch so both v7x TCs get work.
        if B >= 16:
            tb_cap = min(tb_cap, max(SUBLANE, ((b8 // 2) // SUBLANE) * SUBLANE))
        # Pick the tile minimizing batch-padding waste, then maximizing tile size.
        best = None
        for cand in range(SUBLANE, tb_cap + 1, SUBLANE):
            key = (_round_up(b8, cand) - b8, -cand)
            if best is None or key < best[0]:
                best = (key, cand)
        tb = best[1]

    b_pad = _round_up(b8, tb)
    c_pad = _round_up(C, LANE)

    # Pad batch rows with zeros and leave them unmasked (softmax over zeros is
    # well-defined -> no NaNs); padded rows/classes are sliced off below.
    h_p = hidden_states.astype(jnp.float32)
    mask_i = mask.astype(jnp.int32)
    if b_pad != B:
        h_p = jnp.pad(h_p, ((0, b_pad - B), (0, 0), (0, 0)))
        mask_i = jnp.pad(mask_i, ((0, b_pad - B), (0, 0)))

    wa_p = w_attn.reshape(1, 1, H).astype(jnp.float32)
    wfc_p = w_fc.astype(jnp.float32)
    if c_pad != C:
        wfc_p = jnp.pad(wfc_p, ((0, 0), (0, c_pad - C)))
    b_p = jnp.pad(b_fc.astype(jnp.float32), (0, c_pad - C)).reshape(1, c_pad)

    tbc = SUBLANE  # batch rows handled per in-kernel chunk
    kernel = functools.partial(_attn_classifier_kernel, tbc=tbc)

    out = pl.pallas_call(
        kernel,
        out_shape=jax.ShapeDtypeStruct((b_pad, c_pad), jnp.float32),
        grid_spec=pltpu.PrefetchScalarGridSpec(
            num_scalar_prefetch=0,
            grid=(b_pad // tb,),
            in_specs=[
                pl.BlockSpec((tb, S, H), lambda b: (b, 0, 0)),   # hidden states
                pl.BlockSpec((tb, S), lambda b: (b, 0)),         # mask (int32)
                pl.BlockSpec((1, 1, H), lambda b: (0, 0, 0)),    # attention vector
                pl.BlockSpec((H, c_pad), lambda b: (0, 0)),      # classifier weight
                pl.BlockSpec((1, c_pad), lambda b: (0, 0)),      # classifier bias
            ],
            out_specs=pl.BlockSpec((tb, c_pad), lambda b: (b, 0)),
            scratch_shapes=[pltpu.VMEM((tb, H), jnp.float32)],
        ),
        compiler_params=pltpu.CompilerParams(
            dimension_semantics=("parallel",),
            vmem_limit_bytes=int(vmem_limit),
        ),
    )(h_p, mask_i, wa_p, wfc_p, b_p)

    return out[:B, :C]


def reference(hidden_states, mask, w_attn, w_fc, b_fc):
    # Pure-JAX reference mirroring the PyTorch forward.
    q = jnp.einsum("bsh,hk->bs", hidden_states, w_attn)
    q = jnp.where(mask, -jnp.inf, q)
    w = jax.nn.softmax(q, axis=-1)[:, None, :]                   # [B,1,S]
    h = jnp.einsum("bks,bsh->bkh", w, hidden_states)[:, 0, :]    # [B,H]
    return h @ w_fc + b_fc


if __name__ == "__main__":
    key = jax.random.PRNGKey(0)
    k_x, k_wa, k_wf, k_bf, k_x2 = jax.random.split(key, 5)

    # --- small shapes consistent with the module forward ---
    B, S, H, C = 2, 8, 32, 4
    hidden_states = jax.random.normal(k_x, (B, S, H), dtype=jnp.float32)
    lens = jnp.array([S, S - 3], dtype=jnp.int32)
    mask = jnp.arange(S)[None, :] >= lens[:, None]               # [B, S] bool (True == masked)

    w_attn = jax.random.normal(k_wa, (H, 1), dtype=jnp.float32) * 0.1
    w_fc = jax.random.normal(k_wf, (H, C), dtype=jnp.float32) * 0.1
    b_fc = jax.random.normal(k_bf, (C,), dtype=jnp.float32) * 0.1

    out = jax.block_until_ready(
        attention_classifier(hidden_states, mask, w_attn, w_fc, b_fc))
    ref = reference(hidden_states, mask, w_attn, w_fc, b_fc)
    assert out.shape == (B, C)
    assert jnp.allclose(out, ref, atol=1e-5, rtol=1e-5), (out, ref)

    # --- second config: exercises batch padding, a multi-step grid and the in-kernel
    #     row-chunk loop (B=20 -> b_pad=32, two grid steps of tb=16, 2 chunks each) ---
    B2, S2, H2 = 20, 16, 128
    hs2 = jax.random.normal(k_x2, (B2, S2, H2), dtype=jnp.float32)
    lens2 = (S2 - (jnp.arange(B2) % 5)).astype(jnp.int32)        # always >= 12 -> no NaN rows
    mask2 = jnp.arange(S2)[None, :] >= lens2[:, None]
    w_attn2 = jax.random.normal(k_wa, (H2, 1), dtype=jnp.float32) * 0.1
    w_fc2 = jax.random.normal(k_wf, (H2, C), dtype=jnp.float32) * 0.1

    out2 = jax.block_until_ready(
        attention_classifier(hs2, mask2, w_attn2, w_fc2, b_fc, block_b=16))
    ref2 = reference(hs2, mask2, w_attn2, w_fc2, b_fc)
    assert out2.shape == (B2, C)
    assert jnp.allclose(out2, ref2, atol=1e-5, rtol=1e-5), (out2, ref2)

    print("KERNEL_OK")
</pallas_src>

<mosaic_0001>
module attributes {stable_mosaic.version = 11 : i64} {
  func.func @_attn_classifier_kernel(%arg0: i32, %arg1: memref<8x8x32xf32, #tpu.memory_space<vmem>>, %arg2: memref<8x8xi32, #tpu.memory_space<vmem>>, %arg3: memref<1x1x32xf32, #tpu.memory_space<vmem>>, %arg4: memref<32x128xf32, #tpu.memory_space<vmem>>, %arg5: memref<1x128xf32, #tpu.memory_space<vmem>>, %arg6: memref<8x128xf32, #tpu.memory_space<vmem>>, %arg7: memref<8x32xf32, #tpu.memory_space<vmem>>) attributes {dimension_semantics = [#tpu.dimension_semantics<parallel>], iteration_bounds = array<i64: 1>, scalar_prefetch = 0 : i64, scratch_operands = 1 : i64, tpu.core_type = #tpu.core_type<tc>, window_params = [{transform_indices = @transform_0, window_bounds = array<i64: 8, 8, 32>}, {transform_indices = @transform_1, window_bounds = array<i64: 8, 8>}, {pipeline_mode = #tpu.pipeline_mode<synchronous>, transform_indices = @transform_2, window_bounds = array<i64: 1, 1, 32>}, {pipeline_mode = #tpu.pipeline_mode<synchronous>, transform_indices = @transform_3, window_bounds = array<i64: 32, 128>}, {pipeline_mode = #tpu.pipeline_mode<synchronous>, transform_indices = @transform_4, window_bounds = array<i64: 1, 128>}, {transform_indices = @transform_5, window_bounds = array<i64: 8, 128>}]} {
    %c0 = arith.constant 0 : index
    %c0_0 = arith.constant 0 : index
    %c0_1 = arith.constant 0 : index
    %0 = vector.load %arg3[%c0, %c0_0, %c0_1] : memref<1x1x32xf32, #tpu.memory_space<vmem>>, vector<1x1x32xf32>
    %c0_i32 = arith.constant 0 : i32
    %c8_i32 = arith.constant 8 : i32
    %1 = arith.muli %c0_i32, %c8_i32 : i32
    %2 = tpu.assume_multiple %1, 8 : i32
    %3 = arith.index_cast %2 : i32 to index
    %c0_2 = arith.constant 0 : index
    %c0_3 = arith.constant 0 : index
    %4 = vector.load %arg1[%3, %c0_2, %c0_3] : memref<8x8x32xf32, #tpu.memory_space<vmem>>, vector<8x8x32xf32>
    %5 = arith.index_cast %2 : i32 to index
    %c0_4 = arith.constant 0 : index
    %6 = vector.load %arg2[%5, %c0_4] : memref<8x8xi32, #tpu.memory_space<vmem>>, vector<8x8xi32>
    %7 = vector.broadcast %0 : vector<1x1x32xf32> to vector<8x8x32xf32>
    %8 = arith.mulf %4, %7 : vector<8x8x32xf32>
    %cst = arith.constant dense<0.000000e+00> : vector<8x8xf32>
    %9 = vector.multi_reduction <add>, %8, %cst [2] : vector<8x8x32xf32> to vector<8x8xf32>
    %c0_i32_5 = arith.constant 0 : i32
    %10 = vector.broadcast %c0_i32_5 : i32 to vector<8x8xi32>
    %11 = arith.cmpi ne, %6, %10 : vector<8x8xi32>
    %cst_6 = arith.constant 0xFF800000 : f32
    %12 = vector.broadcast %cst_6 : f32 to vector<8x8xf32>
    %13 = arith.select %11, %12, %9 : vector<8x8xi1>, vector<8x8xf32>
    %cst_7 = arith.constant dense<0xFF800000> : vector<8xf32>
    %14 = vector.multi_reduction <maximumf>, %13, %cst_7 [1] : vector<8x8xf32> to vector<8xf32>
    %15 = vector.shape_cast %14 : vector<8xf32> to vector<8x1xf32>
    %16 = vector.broadcast %15 : vector<8x1xf32> to vector<8x8xf32>
    %17 = arith.subf %13, %16 : vector<8x8xf32>
    %18 = math.exp %17 : vector<8x8xf32>
    %cst_8 = arith.constant dense<0.000000e+00> : vector<8xf32>
    %19 = vector.multi_reduction <add>, %18, %cst_8 [1] : vector<8x8xf32> to vector<8xf32>
    %20 = vector.shape_cast %19 : vector<8xf32> to vector<8x1xf32>
    %21 = vector.shape_cast %18 : vector<8x8xf32> to vector<8x8x1xf32>
    %22 = vector.broadcast %21 : vector<8x8x1xf32> to vector<8x8x32xf32>
    %23 = arith.mulf %22, %4 : vector<8x8x32xf32>
    %cst_9 = arith.constant dense<0.000000e+00> : vector<8x32xf32>
    %24 = vector.multi_reduction <add>, %23, %cst_9 [1] : vector<8x8x32xf32> to vector<8x32xf32>
    %25 = tpu.reciprocal %20 : vector<8x1xf32> -> vector<8x1xf32>
    %26 = vector.broadcast %25 : vector<8x1xf32> to vector<8x32xf32>
    %27 = arith.mulf %24, %26 : vector<8x32xf32>
    %28 = arith.index_cast %2 : i32 to index
    %c0_10 = arith.constant 0 : index
    %29 = vector.load %arg7[%28, %c0_10] : memref<8x32xf32, #tpu.memory_space<vmem>>, vector<8x32xf32>
    tpu.vector_store %arg7[%28, %c0_10], %27 {strides = array<i32>} : memref<8x32xf32, #tpu.memory_space<vmem>>, vector<8x32xf32>,
    %c1_i32 = arith.constant 1 : i32
    %c0_11 = arith.constant 0 : index
    %c0_12 = arith.constant 0 : index
    %30 = vector.load %arg7[%c0_11, %c0_12] : memref<8x32xf32, #tpu.memory_space<vmem>>, vector<8x32xf32>
    %c0_13 = arith.constant 0 : index
    %c0_14 = arith.constant 0 : index
    %31 = vector.load %arg4[%c0_13, %c0_14] : memref<32x128xf32, #tpu.memory_space<vmem>>, vector<32x128xf32>
    %cst_15 = arith.constant dense<0.000000e+00> : vector<8x128xf32>
    %32 = tpu.matmul %30, %31, %cst_15 {dimension_numbers = #tpu.dot_dimension_numbers<[1], [0], [0], [1], [0, 0, 1, 1], [], []>} : vector<8x32xf32>, vector<32x128xf32>, vector<8x128xf32> -> vector<8x128xf32>
    %c0_16 = arith.constant 0 : index
    %c0_17 = arith.constant 0 : index
    %33 = vector.load %arg5[%c0_16, %c0_17] : memref<1x128xf32, #tpu.memory_space<vmem>>, vector<1x128xf32>
    %34 = vector.broadcast %33 : vector<1x128xf32> to vector<8x128xf32>
    %35 = arith.addf %32, %34 : vector<8x128xf32>
    %c0_18 = arith.constant 0 : index
    %c0_19 = arith.constant 0 : index
    %36 = vector.load %arg6[%c0_18, %c0_19] : memref<8x128xf32, #tpu.memory_space<vmem>>, vector<8x128xf32>
    tpu.vector_store %arg6[%c0_18, %c0_19], %35 {strides = array<i32>} : memref<8x128xf32, #tpu.memory_space<vmem>>, vector<8x128xf32>,
    return
  }
  func.func @transform_0(%arg0: i32) -> (i32, i32, i32) {
    %c0_i32 = arith.constant 0 : i32
    %c0_i32_0 = arith.constant 0 : i32
    %c0_i32_1 = arith.constant 0 : i32
    return %arg0, %c0_i32, %c0_i32_0 : i32, i32, i32
  }
  func.func @transform_1(%arg0: i32) -> (i32, i32) {
    %c0_i32 = arith.constant 0 : i32
    %c0_i32_0 = arith.constant 0 : i32
    return %arg0, %c0_i32 : i32, i32
  }
  func.func @transform_2(%arg0: i32) -> (i32, i32, i32) {
    %c0_i32 = arith.constant 0 : i32
    %c0_i32_0 = arith.constant 0 : i32
    %c0_i32_1 = arith.constant 0 : i32
    %c0_i32_2 = arith.constant 0 : i32
    return %c0_i32, %c0_i32_0, %c0_i32_1 : i32, i32, i32
  }
  func.func @transform_3(%arg0: i32) -> (i32, i32) {
    %c0_i32 = arith.constant 0 : i32
    %c0_i32_0 = arith.constant 0 : i32
    %c0_i32_1 = arith.constant 0 : i32
    return %c0_i32, %c0_i32_0 : i32, i32
  }
  func.func @transform_4(%arg0: i32) -> (i32, i32) {
    %c0_i32 = arith.constant 0 : i32
    %c0_i32_0 = arith.constant 0 : i32
    %c0_i32_1 = arith.constant 0 : i32
    return %c0_i32, %c0_i32_0 : i32, i32
  }
  func.func @transform_5(%arg0: i32) -> (i32, i32) {
    %c0_i32 = arith.constant 0 : i32
    %c0_i32_0 = arith.constant 0 : i32
    return %arg0, %c0_i32 : i32, i32
  }
}

</mosaic_0001>

<llo_original>
// kernel: attention_classifier.1
$region0: #{attention_classifier.1}
  #allocation0 [shape = 'u32[]', space=smem, size = 0x4, offset = 0x4, fixed_abs, tag = 'smem constant byte address 0x4 - core index']
  #allocation1 [shape = 'u32[72,128]{1,0:T(1,128)}', space=vmem, size = 0x9000, scoped, tag = 'internal scratch']
  #allocation2 [shape = 'f32[8,32]{1,0:T(8,128)}', space=vmem, size = 0x1000, scoped, tag = 'scratch operand']
  %s0 = inlined_call_operand.vmem [shape: f32[8,8,32], index: 0, kind: input, shape index: {}]
  %s1 = inlined_call_operand.vmem [shape: s32[8,8], index: 1, kind: input, shape index: {}]
  %s2 = inlined_call_operand.vmem [shape: f32[1,1,32], index: 2, kind: input, shape index: {}]
  %s3 = inlined_call_operand.vmem [shape: f32[32,128], index: 3, kind: input, shape index: {}]
  %s4 = inlined_call_operand.vmem [shape: f32[1,128], index: 4, kind: input, shape index: {}]
  %s5 = inlined_call_operand.vmem [shape: f32[8,128], index: 5, kind: output, shape index: {}]
  %s6 = sld [smem:[#allocation0]]
  $region30: #{attention_classifier.1} parent=0
    _
  %s8 = ssub.s32 1, %s6
  %s9 = scalar_select 0, %s8, %s6
  // Predicated region
  $region2: #{attention_classifier.1} parent=0 // pred_check
    _
  $region3: #{attention_classifier.1} parent=0 // pred_check_branch
    %11 = sbr.rel (0) target = $region5
  $region4: #{attention_classifier.1} parent=0 // pred_region
    _
  $region5: #{attention_classifier.1} parent=0 // pred_fallthru
    _
  // Predicated region
  $region6: #{attention_classifier.1} parent=0 // pred_check
    _
  $region7: #{attention_classifier.1} parent=0 // pred_check_branch
    %13 = sbr.rel (0) target = $region9
  $region8: #{attention_classifier.1} parent=0 // pred_region
    _
  $region9: #{attention_classifier.1} parent=0 // pred_fallthru
    _
  // Predicated region
  $region10: #{attention_classifier.1} parent=0 // pred_check
    _
  $region11: #{attention_classifier.1} parent=0 // pred_check_branch
    %15 = sbr.rel (0) target = $region13
  $region12: #{attention_classifier.1} parent=0 // pred_region
    _
  $region13: #{attention_classifier.1} parent=0 // pred_fallthru
    _
  // Predicated region
  $region14: #{attention_classifier.1} parent=0 // pred_check
    _
  $region15: #{attention_classifier.1} parent=0 // pred_check_branch
    %17 = sbr.rel (0) target = $region17
  $region16: #{attention_classifier.1} parent=0 // pred_region
    _
  $region17: #{attention_classifier.1} parent=0 // pred_fallthru
    _
  // Predicated region
  $region18: #{attention_classifier.1} parent=0 // pred_check
    _
  $region19: #{attention_classifier.1} parent=0 // pred_check_branch
    %19 = sbr.rel (0) target = $region21
  $region20: #{attention_classifier.1} parent=0 // pred_region
    _
  $region21: #{attention_classifier.1} parent=0 // pred_fallthru
    _
  %v20 = vld [vmem:[%s2] sm:$0x1]
  %s21 = smul.u32 0, 8
  %s22 = scalar_lea.vmem %s0, %s21
  %v23 = vld [vmem:[%s22] sm:$0xff]
  %v24 = vld [vmem:[%s22 + $0x8] sm:$0xff]
  %v25 = vld [vmem:[%s22 + $0x10] sm:$0xff]
  %v26 = vld [vmem:[%s22 + $0x18] sm:$0xff]
  %v27 = vld [vmem:[%s22 + $0x20] sm:$0xff]
  %v28 = vld [vmem:[%s22 + $0x28] sm:$0xff]
  %v29 = vld [vmem:[%s22 + $0x30] sm:$0xff]
  %v30 = vld [vmem:[%s22 + $0x38] sm:$0xff]
  %v31 = vld [vmem:[%s1] sm:$0xff]
  %v33 = vperm.slane %v20, 0
  %v35 = vmul.f32 %v23, %v33
  %v36 = vmul.f32 %v24, %v33
  %v37 = vmul.f32 %v25, %v33
  %v38 = vmul.f32 %v26, %v33
  %v39 = vmul.f32 %v27, %v33
  %v40 = vmul.f32 %v28, %v33
  %v41 = vmul.f32 %v29, %v33
  %v42 = vmul.f32 %v30, %v33
  %vm43 = vcmask 261120
  %v44 = vsel %vm43, %v35, 0.0
  %45 = vadd.xlane.f32.xlu0 %v44
  %v46 = vpop.xlane.xlu0 %45
  %v47 = vsel %vm43, %v36, 0.0
  %48 = vadd.xlane.f32.xlu0 %v47
  %v49 = vpop.xlane.xlu0 %48
  %v50 = vsel %vm43, %v37, 0.0
  %51 = vadd.xlane.f32.xlu0 %v50
  %v52 = vpop.xlane.xlu0 %51
  %v53 = vsel %vm43, %v38, 0.0
  %54 = vadd.xlane.f32.xlu0 %v53
  %v55 = vpop.xlane.xlu0 %54
  %v56 = vsel %vm43, %v39, 0.0
  %57 = vadd.xlane.f32.xlu0 %v56
  %v58 = vpop.xlane.xlu0 %57
  %v59 = vsel %vm43, %v40, 0.0
  %60 = vadd.xlane.f32.xlu0 %v59
  %v61 = vpop.xlane.xlu0 %60
  %v62 = vsel %vm43, %v41, 0.0
  %63 = vadd.xlane.f32.xlu0 %v62
  %v64 = vpop.xlane.xlu0 %63
  %v65 = vsel %vm43, %v42, 0.0
  %66 = vadd.xlane.f32.xlu0 %v65
  %v67 = vpop.xlane.xlu0 %66
  %vm68 = vcmp.ne.s32.totalorder %v31, 0
  %v77 = vlaneseq
  %v78 = vand.u32 %v77, 127
  %v79 = vperm.slane %v46, %v78
  %v80 = vperm.slane %v49, %v78
  %v81 = vperm.slane %v52, %v78
  %v82 = vperm.slane %v55, %v78
  %v83 = vperm.slane %v58, %v78
  %v84 = vperm.slane %v61, %v78
  %v85 = vperm.slane %v64, %v78
  %v86 = vperm.slane %v67, %v78
  %vm87 = vcmask 1041409
  %v88 = vsel %vm87, %v80, %v79
  %vm89 = vcmask 1042434
  %v90 = vsel %vm89, %v81, %v88
  %vm91 = vcmask 1043459
  %v92 = vsel %vm91, %v82, %v90
  %vm93 = vcmask 1044484
  %v94 = vsel %vm93, %v83, %v92
  %vm95 = vcmask 1045509
  %v96 = vsel %vm95, %v84, %v94
  %vm97 = vcmask 1046534
  %v98 = vsel %vm97, %v85, %v96
  %vm99 = vcmask 1047559
  %v100 = vsel %vm99, %v86, %v98
  %v102 = vsel %vm68, -inf, %v100
  %vm103 = vcmask 64512
  %v104 = vsel %vm103, %v102, -inf
  %105 = vmax.xlane.f32.xlu0 %v104
  %v106 = vpop.xlane.xlu0 %105
  %v107 = vsub.f32 %v102, %v106
  %v108 = vmul.f32 %v107, 1.442695
  %v109 = vpow.pop %v108
  %v110 = vsel %vm103, %v109, 0.0
  %111 = vadd.xlane.f32.xlu0 %v110
  %v112 = vpop.xlane.xlu0 %111
  %v113 = vperm.slane %v109, 0
  %v114 = vlaneseq
  %v115 = vshrl.u32 %v114, 7
  %117 = vset.pattern.permute.xlu0 %v115
  %118 = vperm.xlu0 %117, %v113
  %v119 = vpop.permute.xlu0 %118
  %v120 = vperm.slane %v109, 1
  %v121 = vlaneseq
  %v122 = vshrl.u32 %v121, 7
  %124 = vset.pattern.permute.xlu0 %v122
  %125 = vperm.xlu0 %124, %v120
  %v126 = vpop.permute.xlu0 %125
  %v127 = vperm.slane %v109, 2
  %v128 = vlaneseq
  %v129 = vshrl.u32 %v128, 7
  %131 = vset.pattern.permute.xlu0 %v129
  %132 = vperm.xlu0 %131, %v127
  %v133 = vpop.permute.xlu0 %132
  %v134 = vperm.slane %v109, 3
  %v135 = vlaneseq
  %v136 = vshrl.u32 %v135, 7
  %138 = vset.pattern.permute.xlu0 %v136
  %139 = vperm.xlu0 %138, %v134
  %v140 = vpop.permute.xlu0 %139
  %v141 = vperm.slane %v109, 4
  %v142 = vlaneseq
  %v143 = vshrl.u32 %v142, 7
  %145 = vset.pattern.permute.xlu0 %v143
  %146 = vperm.xlu0 %145, %v141
  %v147 = vpop.permute.xlu0 %146
  %v148 = vperm.slane %v109, 5
  %v149 = vlaneseq
  %v150 = vshrl.u32 %v149, 7
  %152 = vset.pattern.permute.xlu0 %v150
  %153 = vperm.xlu0 %152, %v148
  %v154 = vpop.permute.xlu0 %153
  %v155 = vperm.slane %v109, 6
  %v156 = vlaneseq
  %v157 = vshrl.u32 %v156, 7
  %159 = vset.pattern.permute.xlu0 %v157
  %160 = vperm.xlu0 %159, %v155
  %v161 = vpop.permute.xlu0 %160
  %v162 = vperm.slane %v109, 7
  %v163 = vlaneseq
  %v164 = vshrl.u32 %v163, 7
  %166 = vset.pattern.permute.xlu0 %v164
  %167 = vperm.xlu0 %166, %v162
  %v168 = vpop.permute.xlu0 %167
  %v169 = vmul.f32 %v119, %v23
  %v170 = vmul.f32 %v126, %v24
  %v171 = vmul.f32 %v133, %v25
  %v172 = vmul.f32 %v140, %v26
  %v173 = vmul.f32 %v147, %v27
  %v174 = vmul.f32 %v154, %v28
  %v175 = vmul.f32 %v161, %v29
  %v176 = vmul.f32 %v168, %v30
  %v177 = vsel %vm43, %v169, 0.0
  %v178 = vrot.slane %v177, 4
  %v179 = vadd.f32 %v177, %v178
  %v180 = vrot.slane %v179, 2
  %v181 = vadd.f32 %v179, %v180
  %v182 = vrot.slane %v181, 1
  %v183 = vadd.f32 %v181, %v182
  %v184 = vsel %vm43, %v170, 0.0
  %v185 = vrot.slane %v184, 4
  %v186 = vadd.f32 %v184, %v185
  %v187 = vrot.slane %v186, 2
  %v188 = vadd.f32 %v186, %v187
  %v189 = vrot.slane %v188, 1
  %v190 = vadd.f32 %v188, %v189
  %v191 = vsel %vm43, %v171, 0.0
  %v192 = vrot.slane %v191, 4
  %v193 = vadd.f32 %v191, %v192
  %v194 = vrot.slane %v193, 2
  %v195 = vadd.f32 %v193, %v194
  %v196 = vrot.slane %v195, 1
  %v197 = vadd.f32 %v195, %v196
  %v198 = vsel %vm43, %v172, 0.0
  %v199 = vrot.slane %v198, 4
  %v200 = vadd.f32 %v198, %v199
  %v201 = vrot.slane %v200, 2
  %v202 = vadd.f32 %v200, %v201
  %v203 = vrot.slane %v202, 1
  %v204 = vadd.f32 %v202, %v203
  %v205 = vsel %vm43, %v173, 0.0
  %v206 = vrot.slane %v205, 4
  %v207 = vadd.f32 %v205, %v206
  %v208 = vrot.slane %v207, 2
  %v209 = vadd.f32 %v207, %v208
  %v210 = vrot.slane %v209, 1
  %v211 = vadd.f32 %v209, %v210
  %v212 = vsel %vm43, %v174, 0.0
  %v213 = vrot.slane %v212, 4
  %v214 = vadd.f32 %v212, %v213
  %v215 = vrot.slane %v214, 2
  %v216 = vadd.f32 %v214, %v215
  %v217 = vrot.slane %v216, 1
  %v218 = vadd.f32 %v216, %v217
  %v219 = vsel %vm43, %v175, 0.0
  %v220 = vrot.slane %v219, 4
  %v221 = vadd.f32 %v219, %v220
  %v222 = vrot.slane %v221, 2
  %v223 = vadd.f32 %v221, %v222
  %v224 = vrot.slane %v223, 1
  %v225 = vadd.f32 %v223, %v224
  %v226 = vsel %vm43, %v176, 0.0
  %v227 = vrot.slane %v226, 4
  %v228 = vadd.f32 %v226, %v227
  %v229 = vrot.slane %v228, 2
  %v230 = vadd.f32 %v228, %v229
  %v231 = vrot.slane %v230, 1
  %v232 = vadd.f32 %v230, %v231
  %v233 = vrcp.pop %v112
  %v234 = vmul.f32 %v112, %v233
  %v235 = vsub.f32 1.0, %v234
  %v236 = vmul.f32 %v233, %v235
  %v237 = vadd.f32 %v233, %v236
  %vm238 = vweird.f32 %v112
  %vm239 = vweird.f32 %v233
  %vm240 = vmor %vm238, %vm239
  %v241 = vsel %vm240, %v233, %v237
  %v242 = vand.u32 2147483647, %v112
  %vm243 = vcmp.eq.f32.partialorder %v242, 8.507059e+37
  %v244 = vand.u32 %v112, 2147483648
  %v245 = vor.u32 1.1754944e-38, %v244
  %v246 = vsel %vm243, %v245, %v241
  %v248 = vrot.slane %v246, 1
  %v249 = vrot.slane %v246, 2
  %v250 = vrot.slane %v246, 3
  %v251 = vrot.slane %v246, 4
  %v252 = vrot.slane %v246, 5
  %v253 = vrot.slane %v246, 6
  %v254 = vrot.slane %v246, 7
  %v263 = vmul.f32 %v183, %v246
  %v264 = vmul.f32 %v190, %v248
  %v265 = vmul.f32 %v197, %v249
  %v266 = vmul.f32 %v204, %v250
  %v267 = vmul.f32 %v211, %v251
  %v268 = vmul.f32 %v218, %v252
  %v269 = vmul.f32 %v225, %v253
  %v270 = vmul.f32 %v232, %v254
  %v279 = vrot.slane %v264, 7
  %v280 = vsel %vm87, %v279, %v263
  %v281 = vrot.slane %v265, 6
  %v282 = vsel %vm89, %v281, %v280
  %v283 = vrot.slane %v266, 5
  %v284 = vsel %vm91, %v283, %v282
  %v285 = vrot.slane %v267, 4
  %v286 = vsel %vm93, %v285, %v284
  %v287 = vrot.slane %v268, 3
  %v288 = vsel %vm95, %v287, %v286
  %v289 = vrot.slane %v269, 2
  %v290 = vsel %vm97, %v289, %v288
  %v291 = vrot.slane %v270, 1
  %v292 = vsel %vm99, %v291, %v290
  %294 = vst.msk [vmem:[#allocation2] sm:$0xff] %vm43, %v292
  %v295 = vld [vmem:[#allocation2] sm:$0xff]
  %v296 = vld [vmem:[%s3] sm:$0xff]
  %v297 = vld [vmem:[%s3 + $0x8] sm:$0xff]
  %v298 = vld [vmem:[%s3 + $0x10] sm:$0xff]
  %v299 = vld [vmem:[%s3 + $0x18] sm:$0xff]
  %v300 = vld [vmem:[%s4] sm:$0x1]
  %v302 = vperm.slane %v300, 0
  %v305 = vsel %vm43, %v295, 0
  %307 = vmatpush.msra.mxu0 0.0
  %308 = vmatpush.msra.mxu0 0.0
  %309 = vmatpush.msra.mxu0 0.0
  %310 = vmatpush.msra.mxu0 0.0
  %311 = vmatpush.msra.mxu0 0.0
  %312 = vmatpush.msra.mxu0 0.0
  %313 = vmatpush.msra.mxu0 0.0
  %314 = vmatpush.msra.mxu0 0.0
  %315 = vmatpush.msra.mxu0 0.0
  %316 = vmatpush.msra.mxu0 0.0
  %317 = vmatpush.msra.mxu0 0.0
  %318 = vmatpush.msra.mxu0 0.0
  %319 = vmatpush.msra.mxu0 %v299
  %320 = vmatpush.msra.mxu0 %v298
  %321 = vmatpush.msra.mxu0 %v297
  %322 = vmatpush.msra.mxu0 %v296
  %323 = vmatmul.f32.gmra.mxu0 %v305
  %v324 = vpop.f32.mrf.mxu0
  %v325 = vadd.f32 %v302, %v324
  %326 = vdwg.mxu0
  %327 = vst [vmem:[%s5] sm:$0xff] %v325
  // Predicated region
  $region22: #{attention_classifier.1} parent=0 // pred_check
    _
  $region23: #{attention_classifier.1} parent=0 // pred_check_branch
    %329 = sbr.rel (0) target = $region25
  $region24: #{attention_classifier.1} parent=0 // pred_region
    _
  $region25: #{attention_classifier.1} parent=0 // pred_fallthru
    _
  // Predicated region
  $region26: #{attention_classifier.1} parent=0 // pred_check
    _
  $region27: #{attention_classifier.1} parent=0 // pred_check_branch
    %331 = sbr.rel (0) target = $region29
  $region28: #{attention_classifier.1} parent=0 // pred_region
    _
  $region29: #{attention_classifier.1} parent=0 // pred_fallthru
    _

</llo_original>
